<compile_context>
chip_gen: v7x
topology: tpu7x:2x2x1
jax: 0.10.0
libtpu: 0.0.40
codegen_flags: <defaults>
</compile_context>

<pallas_src>
import jax
import jax.numpy as jnp
from jax import lax
from jax.experimental import pallas as pl
from jax.experimental.pallas import tpu as pltpu


def _round_up(x, m):
    return ((x + m - 1) // m) * m


def _encoder_kernel(w_ref, d_ref, x_ref, z_ref, acc_ref):
    k = pl.program_id(1)

    @pl.when(k == 0)
    def _():
        acc_ref[...] = jnp.zeros_like(acc_ref)

    # acc += W_k^T @ X_k  -- contract dim 0 of both operands directly on the
    # MXU; the transpose is never materialized.
    acc_ref[...] += lax.dot_general(
        w_ref[...],
        x_ref[...],
        dimension_numbers=(((0,), (0,)), ((), ())),
        preferred_element_type=jnp.float32,
    )

    @pl.when(k == pl.num_programs(1) - 1)
    def _():
        # Z = D @ tanh(WX): tanh in f32 on the EUP, f32-accumulated MXU matmul.
        t = jnp.tanh(acc_ref[...])
        z = jnp.dot(d_ref[...], t, preferred_element_type=jnp.float32)
        z_ref[...] = z.astype(z_ref.dtype)


def encoder_forward(W, D, X, *, tn=512, tk=512, compute_dtype=jnp.float32):
    """W: (input_dim, output_dim), D: (output_dim, output_dim), X: (input_dim, N)."""
    input_dim, output_dim = W.shape
    assert D.shape == (output_dim, output_dim)
    assert X.shape[0] == input_dim
    n = X.shape[1]

    # Lane-dense N tile: multiple of 128, no bigger than needed.
    tn = min(tn, _round_up(n, 128))
    n_pad = _round_up(n, tn)
    # K tile: multiple of 8 sublanes (or the whole, 8-padded, input_dim).
    tk = min(tk, _round_up(input_dim, 8))
    k_pad = _round_up(input_dim, tk)

    Wc = W.astype(compute_dtype)
    Xc = X.astype(compute_dtype)
    Dc = D.astype(jnp.float32)  # keep D/tanh path in f32 (v5e has no bf16 EUP)
    if k_pad != input_dim:
        Wc = jnp.pad(Wc, ((0, k_pad - input_dim), (0, 0)))
        Xc = jnp.pad(Xc, ((0, k_pad - input_dim), (0, 0)))
    if n_pad != n:
        Xc = jnp.pad(Xc, ((0, 0), (0, n_pad - n)))

    n_tiles = n_pad // tn
    k_tiles = k_pad // tk

    # Explicit VMEM byte budget: double-buffered pipelined operands + scratch.
    isz = jnp.dtype(compute_dtype).itemsize
    est = (
        2 * (tk * output_dim * isz            # W tile
             + tk * tn * isz                  # X tile
             + output_dim * output_dim * 4    # D (resident)
             + output_dim * tn * 4)           # Z tile
        + output_dim * tn * 4                 # f32 accumulator scratch
    )
    vmem_limit = int(min(max(2 * est, 32 * 1024 * 1024), 64 * 1024 * 1024))

    z_pad = pl.pallas_call(
        _encoder_kernel,
        out_shape=jax.ShapeDtypeStruct((output_dim, n_pad), jnp.float32),
        grid_spec=pltpu.PrefetchScalarGridSpec(
            num_scalar_prefetch=0,
            grid=(n_tiles, k_tiles),  # reduction axis (K) last
            in_specs=[
                pl.BlockSpec((tk, output_dim), lambda i, k: (k, 0)),           # W
                pl.BlockSpec((output_dim, output_dim), lambda i, k: (0, 0)),   # D
                pl.BlockSpec((tk, tn), lambda i, k: (k, i)),                   # X
            ],
            out_specs=pl.BlockSpec((output_dim, tn), lambda i, k: (0, i)),     # Z
            scratch_shapes=[pltpu.VMEM((output_dim, tn), jnp.float32)],
        ),
        compiler_params=pltpu.CompilerParams(
            dimension_semantics=("parallel", "arbitrary"),
            vmem_limit_bytes=vmem_limit,
        ),
    )(Wc, Dc, Xc)

    return z_pad[:, :n]


def encoder_reference(W, D, X):
    return D @ jnp.tanh(W.T @ X)


if __name__ == "__main__":
    input_dim, output_dim, n = 32, 16, 8

    key = jax.random.PRNGKey(0)
    kw, kd, kx = jax.random.split(key, 3)
    # Deterministic parameter init (mimics torch.randn in __init__).
    W = jax.random.normal(kw, (input_dim, output_dim), dtype=jnp.float32)
    D = jax.random.normal(kd, (output_dim, output_dim), dtype=jnp.float32)
    X = jax.random.normal(kx, (input_dim, n), dtype=jnp.float32)

    fwd = jax.jit(encoder_forward)
    Z = fwd(W, D, X)
    Z = jax.block_until_ready(Z)

    Z_ref = encoder_reference(W, D, X)
    assert Z.shape == (output_dim, n)
    assert jnp.allclose(Z, Z_ref, atol=1e-4, rtol=1e-4)

    print("KERNEL_OK")
</pallas_src>

<mosaic_0001>
module attributes {stable_mosaic.version = 11 : i64} {
  func.func @_encoder_kernel(%arg0: i32, %arg1: i32, %arg2: memref<32x16xf32, #tpu.memory_space<vmem>>, %arg3: memref<16x16xf32, #tpu.memory_space<vmem>>, %arg4: memref<32x128xf32, #tpu.memory_space<vmem>>, %arg5: memref<16x128xf32, #tpu.memory_space<vmem>>, %arg6: memref<16x128xf32, #tpu.memory_space<vmem>>) attributes {dimension_semantics = [#tpu.dimension_semantics<parallel>, #tpu.dimension_semantics<arbitrary>], iteration_bounds = array<i64: 1, 1>, scalar_prefetch = 0 : i64, scratch_operands = 1 : i64, tpu.core_type = #tpu.core_type<tc>, window_params = [{transform_indices = @transform_0, window_bounds = array<i64: 32, 16>}, {pipeline_mode = #tpu.pipeline_mode<synchronous>, transform_indices = @transform_1, window_bounds = array<i64: 16, 16>}, {transform_indices = @transform_2, window_bounds = array<i64: 32, 128>}, {transform_indices = @transform_3, window_bounds = array<i64: 16, 128>}]} {
    %c0_i32 = arith.constant 0 : i32
    %0 = arith.cmpi eq, %arg1, %c0_i32 : i32
    %1 = arith.extui %0 : i1 to i32
    %c0_i32_0 = arith.constant 0 : i32
    %2 = arith.cmpi ne, %1, %c0_i32_0 : i32
    scf.if %2 {
      %cst_10 = arith.constant 0.000000e+00 : f32
      %12 = vector.broadcast %cst_10 : f32 to vector<16x128xf32>
      %c0_11 = arith.constant 0 : index
      %c0_12 = arith.constant 0 : index
      %13 = vector.load %arg6[%c0_11, %c0_12] : memref<16x128xf32, #tpu.memory_space<vmem>>, vector<16x128xf32>
      tpu.vector_store %arg6[%c0_11, %c0_12], %12 {strides = array<i32>} : memref<16x128xf32, #tpu.memory_space<vmem>>, vector<16x128xf32>,
    } else {
    }
    %c0 = arith.constant 0 : index
    %c0_1 = arith.constant 0 : index
    %3 = vector.load %arg6[%c0, %c0_1] : memref<16x128xf32, #tpu.memory_space<vmem>>, vector<16x128xf32>
    %c0_2 = arith.constant 0 : index
    %c0_3 = arith.constant 0 : index
    %4 = vector.load %arg2[%c0_2, %c0_3] : memref<32x16xf32, #tpu.memory_space<vmem>>, vector<32x16xf32>
    %c0_4 = arith.constant 0 : index
    %c0_5 = arith.constant 0 : index
    %5 = vector.load %arg4[%c0_4, %c0_5] : memref<32x128xf32, #tpu.memory_space<vmem>>, vector<32x128xf32>
    %cst = arith.constant dense<0.000000e+00> : vector<16x128xf32>
    %6 = tpu.matmul %4, %5, %cst {dimension_numbers = #tpu.dot_dimension_numbers<[0], [0], [1], [1], [0, 1, 1, 1], [], []>} : vector<32x16xf32>, vector<32x128xf32>, vector<16x128xf32> -> vector<16x128xf32>
    %7 = arith.addf %3, %6 : vector<16x128xf32>
    %c0_6 = arith.constant 0 : index
    %c0_7 = arith.constant 0 : index
    %8 = vector.load %arg6[%c0_6, %c0_7] : memref<16x128xf32, #tpu.memory_space<vmem>>, vector<16x128xf32>
    tpu.vector_store %arg6[%c0_6, %c0_7], %7 {strides = array<i32>} : memref<16x128xf32, #tpu.memory_space<vmem>>, vector<16x128xf32>,
    %c0_i32_8 = arith.constant 0 : i32
    %9 = arith.cmpi eq, %arg1, %c0_i32_8 : i32
    %10 = arith.extui %9 : i1 to i32
    %c0_i32_9 = arith.constant 0 : i32
    %11 = arith.cmpi ne, %10, %c0_i32_9 : i32
    scf.if %11 {
      %c0_10 = arith.constant 0 : index
      %c0_11 = arith.constant 0 : index
      %12 = vector.load %arg6[%c0_10, %c0_11] : memref<16x128xf32, #tpu.memory_space<vmem>>, vector<16x128xf32>
      %13 = math.tanh %12 : vector<16x128xf32>
      %c0_12 = arith.constant 0 : index
      %c0_13 = arith.constant 0 : index
      %14 = vector.load %arg3[%c0_12, %c0_13] : memref<16x16xf32, #tpu.memory_space<vmem>>, vector<16x16xf32>
      %cst_14 = arith.constant dense<0.000000e+00> : vector<16x128xf32>
      %15 = tpu.matmul %14, %13, %cst_14 {dimension_numbers = #tpu.dot_dimension_numbers<[1], [0], [0], [1], [0, 0, 1, 1], [], []>} : vector<16x16xf32>, vector<16x128xf32>, vector<16x128xf32> -> vector<16x128xf32>
      %c0_15 = arith.constant 0 : index
      %c0_16 = arith.constant 0 : index
      %16 = vector.load %arg5[%c0_15, %c0_16] : memref<16x128xf32, #tpu.memory_space<vmem>>, vector<16x128xf32>
      tpu.vector_store %arg5[%c0_15, %c0_16], %15 {strides = array<i32>} : memref<16x128xf32, #tpu.memory_space<vmem>>, vector<16x128xf32>,
    } else {
    }
    return
  }
  func.func @transform_0(%arg0: i32, %arg1: i32) -> (i32, i32) {
    %c0_i32 = arith.constant 0 : i32
    %c0_i32_0 = arith.constant 0 : i32
    return %arg1, %c0_i32 : i32, i32
  }
  func.func @transform_1(%arg0: i32, %arg1: i32) -> (i32, i32) {
    %c0_i32 = arith.constant 0 : i32
    %c0_i32_0 = arith.constant 0 : i32
    %c0_i32_1 = arith.constant 0 : i32
    return %c0_i32, %c0_i32_0 : i32, i32
  }
  func.func @transform_2(%arg0: i32, %arg1: i32) -> (i32, i32) {
    %c0_i32 = arith.constant 0 : i32
    return %arg1, %arg0 : i32, i32
  }
  func.func @transform_3(%arg0: i32, %arg1: i32) -> (i32, i32) {
    %c0_i32 = arith.constant 0 : i32
    %c0_i32_0 = arith.constant 0 : i32
    return %c0_i32, %arg0 : i32, i32
  }
}

</mosaic_0001>

<llo_original>
// kernel: encoder_forward.1
$region0: #{encoder_forward.1}
  #allocation0 [shape = 'u32[]', space=smem, size = 0x4, offset = 0x4, fixed_abs, tag = 'smem constant byte address 0x4 - core index']
  #allocation1 [shape = 'u32[144,128]{1,0:T(1,128)}', space=vmem, size = 0x12000, scoped, tag = 'internal scratch']
  #allocation2 [shape = 'f32[16,128]{1,0:T(8,128)}', space=vmem, size = 0x2000, scoped, tag = 'scratch operand']
  %s0 = inlined_call_operand.vmem [shape: f32[32,16], index: 0, kind: input, shape index: {}]
  %s1 = inlined_call_operand.vmem [shape: f32[16,16], index: 1, kind: input, shape index: {}]
  %s2 = inlined_call_operand.vmem [shape: f32[32,128], index: 2, kind: input, shape index: {}]
  %s3 = inlined_call_operand.vmem [shape: f32[16,128], index: 3, kind: output, shape index: {}]
  %s4 = sld [smem:[#allocation0]]
  $region30: #{encoder_forward.1} parent=0
    _
  %s6 = ssub.s32 1, %s4
  %s7 = scalar_select 0, %s6, %s4
  // Predicated region
  $region2: #{encoder_forward.1} parent=0 // pred_check
    _
  $region3: #{encoder_forward.1} parent=0 // pred_check_branch
    %9 = sbr.rel (0) target = $region5
  $region4: #{encoder_forward.1} parent=0 // pred_region
    _
  $region5: #{encoder_forward.1} parent=0 // pred_fallthru
    _
  // Predicated region
  $region6: #{encoder_forward.1} parent=0 // pred_check
    _
  $region7: #{encoder_forward.1} parent=0 // pred_check_branch
    %11 = sbr.rel (0) target = $region9
  $region8: #{encoder_forward.1} parent=0 // pred_region
    _
  $region9: #{encoder_forward.1} parent=0 // pred_fallthru
    _
  // Predicated region
  $region10: #{encoder_forward.1} parent=0 // pred_check
    _
  $region11: #{encoder_forward.1} parent=0 // pred_check_branch
    %13 = sbr.rel (0) target = $region13
  $region12: #{encoder_forward.1} parent=0 // pred_region
    _
  $region13: #{encoder_forward.1} parent=0 // pred_fallthru
    _
  %p14 = scmp.eq.s32.totalorder 0, 0
  // Predicated region
  $region14: #{encoder_forward.1} parent=0 // pred_check
    %p15 = pneg %p14
  $region15: #{encoder_forward.1} parent=0 // pred_check_branch
    %17 = sbr.rel (%p15) target = $region17
  $region16: #{encoder_forward.1} parent=0 // pred_region
    %18 = vst [vmem:[#allocation2] sm:$0xff] 0.0
    %19 = vst [vmem:[#allocation2 + $0x8] sm:$0xff] 0.0
  $region17: #{encoder_forward.1} parent=0 // pred_fallthru
    _
  %v20 = vld [vmem:[#allocation2] sm:$0xff]
  %v21 = vld [vmem:[#allocation2 + $0x8] sm:$0xff]
  %v22 = vld [vmem:[%s0] sm:$0xff]
  %v23 = vld [vmem:[%s0 + $0x8] sm:$0xff]
  %v24 = vld [vmem:[%s0 + $0x10] sm:$0xff]
  %v25 = vld [vmem:[%s0 + $0x18] sm:$0xff]
  %v26 = vld [vmem:[%s2] sm:$0xff]
  %v27 = vld [vmem:[%s2 + $0x8] sm:$0xff]
  %v28 = vld [vmem:[%s2 + $0x10] sm:$0xff]
  %v29 = vld [vmem:[%s2 + $0x18] sm:$0xff]
  %30 = vxpose.xlu0.b32.start [1/16] %v22, 128
  %31 = vxpose.xlu0.b32.cont [2/16] %v23, 128
  %32 = vxpose.xlu0.b32.cont [3/16] %v24, 128
  %33 = vxpose.xlu0.b32.cont [4/16] %v25, 128
  %34 = vxpose.xlu0.b32.cont [5/16] 0.0, 128
  %35 = vxpose.xlu0.b32.cont [6/16] 0.0, 128
  %36 = vxpose.xlu0.b32.cont [7/16] 0.0, 128
  %37 = vxpose.xlu0.b32.cont [8/16] 0.0, 128
  %38 = vxpose.xlu0.b32.cont [9/16] 0.0, 128
  %39 = vxpose.xlu0.b32.cont [10/16] 0.0, 128
  %40 = vxpose.xlu0.b32.cont [11/16] 0.0, 128
  %41 = vxpose.xlu0.b32.cont [12/16] 0.0, 128
  %42 = vxpose.xlu0.b32.cont [13/16] 0.0, 128
  %43 = vxpose.xlu0.b32.cont [14/16] 0.0, 128
  %44 = vxpose.xlu0.b32.cont [15/16] 0.0, 128
  %45 = vxpose.xlu0.b32.end [16/16] 0.0, 128
  %v46 = vpop.trf.xlu0
  %v47 = vpop.trf.xlu0
  %v48 = vpop.trf.xlu0
  %v49 = vpop.trf.xlu0
  %v50 = vpop.trf.xlu0
  %v51 = vpop.trf.xlu0
  %v52 = vpop.trf.xlu0
  %v53 = vpop.trf.xlu0
  %v54 = vpop.trf.xlu0
  %v55 = vpop.trf.xlu0
  %v56 = vpop.trf.xlu0
  %v57 = vpop.trf.xlu0
  %v58 = vpop.trf.xlu0
  %v59 = vpop.trf.xlu0
  %v60 = vpop.trf.xlu0
  %v61 = vpop.trf.xlu0
  %vm62 = vcmask 261120
  %v64 = vsel %vm62, %v46, 0
  %v67 = vsel %vm62, %v47, 0
  %69 = vmatprep.subr.mxu0 0.0
  %70 = vmatpush1.msra.mxu0 %v26
  %71 = vmatprep.subr.mxu0 0.0
  %72 = vmatpush1.msra.mxu0 %v27
  %73 = vmatprep.subr.mxu0 0.0
  %74 = vmatpush1.msra.mxu0 %v28
  %75 = vmatprep.subr.mxu0 0.0
  %76 = vmatpush1.msra.mxu0 %v29
  %77 = vmatprep.subr.mxu0 0.0
  %78 = vmatpush1.msra.mxu0 0.0
  %79 = vmatprep.subr.mxu0 0.0
  %80 = vmatpush1.msra.mxu0 0.0
  %81 = vmatprep.subr.mxu0 0.0
  %82 = vmatpush1.msra.mxu0 0.0
  %83 = vmatprep.subr.mxu0 0.0
  %84 = vmatpush1.msra.mxu0 0.0
  %85 = vmatprep.subr.mxu0 0.0
  %86 = vmatpush1.msra.mxu0 0.0
  %87 = vmatprep.subr.mxu0 0.0
  %88 = vmatpush1.msra.mxu0 0.0
  %89 = vmatprep.subr.mxu0 0.0
  %90 = vmatpush1.msra.mxu0 0.0
  %91 = vmatprep.subr.mxu0 0.0
  %92 = vmatpush1.msra.mxu0 0.0
  %93 = vmatprep.subr.mxu0 0.0
  %94 = vmatpush1.msra.mxu0 0.0
  %95 = vmatprep.subr.mxu0 0.0
  %96 = vmatpush1.msra.mxu0 0.0
  %97 = vmatprep.subr.mxu0 0.0
  %98 = vmatpush1.msra.mxu0 0.0
  %99 = vmatprep.subr.mxu0 0.0
  %100 = vmatpush1.msra.mxu0 0.0
  %101 = vmatprep.subr.mxu0 0.0
  %102 = vmatpush1.msra.mxu0 0.0
  %103 = vmatprep.subr.mxu0 0.0
  %104 = vmatpush1.msra.mxu0 0.0
  %105 = vmatprep.subr.mxu0 0.0
  %106 = vmatpush1.msra.mxu0 0.0
  %107 = vmatprep.subr.mxu0 0.0
  %108 = vmatpush1.msra.mxu0 0.0
  %109 = vmatprep.subr.mxu0 0.0
  %110 = vmatpush1.msra.mxu0 0.0
  %111 = vmatprep.subr.mxu0 0.0
  %112 = vmatpush1.msra.mxu0 0.0
  %113 = vmatprep.subr.mxu0 0.0
  %114 = vmatpush1.msra.mxu0 0.0
  %115 = vmatprep.subr.mxu0 0.0
  %116 = vmatpush1.msra.mxu0 0.0
  %117 = vmatprep.subr.mxu0 0.0
  %118 = vmatpush1.msra.mxu0 0.0
  %119 = vmatprep.subr.mxu0 0.0
  %120 = vmatpush1.msra.mxu0 0.0
  %121 = vmatprep.subr.mxu0 0.0
  %122 = vmatpush1.msra.mxu0 0.0
  %123 = vmatprep.subr.mxu0 0.0
  %124 = vmatpush1.msra.mxu0 0.0
  %125 = vmatprep.subr.mxu0 0.0
  %126 = vmatpush1.msra.mxu0 0.0
  %127 = vmatprep.subr.mxu0 0.0
  %128 = vmatpush1.msra.mxu0 0.0
  %129 = vmatprep.subr.mxu0 0.0
  %130 = vmatpush1.msra.mxu0 0.0
  %131 = vmatprep.subr.mxu0 0.0
  %132 = vmatpush1.msra.mxu0 0.0
  %133 = vmatprep.mubr.f32.mxu0 0.0
  %134 = vmatmul.mubr.f32.gmra.mrb[0].mxu0 %v64
  %v135 = vpop.f32.mrb[0].mxu0
  %v136 = vadd.f32 0.0, %v135
  %v137 = vpop.f32.mrb[0].mxu0
  %138 = vmatprep.mubr.f32.mxu0 0.0
  %139 = vmatmul.mubr.f32.gmra.mrb[0].mxu0 %v67
  %v140 = vpop.f32.mrb[0].mxu0
  %v141 = vadd.f32 0.0, %v140
  %v142 = vpop.f32.mrb[0].mxu0
  %143 = vdwg.mxu0
  %v144 = vadd.f32 %v20, %v136
  %v145 = vadd.f32 %v21, %v141
  %146 = vst [vmem:[#allocation2] sm:$0xff] %v144
  %147 = vst [vmem:[#allocation2 + $0x8] sm:$0xff] %v145
  // Predicated region
  $region18: #{encoder_forward.1} parent=0 // pred_check
    %p148 = pneg %p14
  $region19: #{encoder_forward.1} parent=0 // pred_check_branch
    %150 = sbr.rel (%p148) target = $region21
  $region20: #{encoder_forward.1} parent=0 // pred_region
    %v151 = vld [vmem:[#allocation2] sm:$0xff]
    %v152 = vld [vmem:[#allocation2 + $0x8] sm:$0xff]
    %v153 = vtanh.pop %v151
    %v154 = vtanh.pop %v152
    %v155 = vld [vmem:[%s1] sm:$0xff]
    %v156 = vld [vmem:[%s1 + $0x8] sm:$0xff]
    %vm157 = vcmask 130048
    %v159 = vsel %vm157, %v155, 0
    %v162 = vsel %vm157, %v156, 0
    %164 = vmatprep.subr.mxu0 0.0
    %165 = vmatpush1.msra.mxu0 %v153
    %166 = vmatprep.subr.mxu0 0.0
    %167 = vmatpush1.msra.mxu0 %v154
    %168 = vmatprep.subr.mxu0 0.0
    %169 = vmatpush1.msra.mxu0 0.0
    %170 = vmatprep.subr.mxu0 0.0
    %171 = vmatpush1.msra.mxu0 0.0
    %172 = vmatprep.subr.mxu0 0.0
    %173 = vmatpush1.msra.mxu0 0.0
    %174 = vmatprep.subr.mxu0 0.0
    %175 = vmatpush1.msra.mxu0 0.0
    %176 = vmatprep.subr.mxu0 0.0
    %177 = vmatpush1.msra.mxu0 0.0
    %178 = vmatprep.subr.mxu0 0.0
    %179 = vmatpush1.msra.mxu0 0.0
    %180 = vmatprep.subr.mxu0 0.0
    %181 = vmatpush1.msra.mxu0 0.0
    %182 = vmatprep.subr.mxu0 0.0
    %183 = vmatpush1.msra.mxu0 0.0
    %184 = vmatprep.subr.mxu0 0.0
    %185 = vmatpush1.msra.mxu0 0.0
    %186 = vmatprep.subr.mxu0 0.0
    %187 = vmatpush1.msra.mxu0 0.0
    %188 = vmatprep.subr.mxu0 0.0
    %189 = vmatpush1.msra.mxu0 0.0
    %190 = vmatprep.subr.mxu0 0.0
    %191 = vmatpush1.msra.mxu0 0.0
    %192 = vmatprep.subr.mxu0 0.0
    %193 = vmatpush1.msra.mxu0 0.0
    %194 = vmatprep.subr.mxu0 0.0
    %195 = vmatpush1.msra.mxu0 0.0
    %196 = vmatprep.subr.mxu0 0.0
    %197 = vmatpush1.msra.mxu0 0.0
    %198 = vmatprep.subr.mxu0 0.0
    %199 = vmatpush1.msra.mxu0 0.0
    %200 = vmatprep.subr.mxu0 0.0
    %201 = vmatpush1.msra.mxu0 0.0
    %202 = vmatprep.subr.mxu0 0.0
    %203 = vmatpush1.msra.mxu0 0.0
    %204 = vmatprep.subr.mxu0 0.0
    %205 = vmatpush1.msra.mxu0 0.0
    %206 = vmatprep.subr.mxu0 0.0
    %207 = vmatpush1.msra.mxu0 0.0
    %208 = vmatprep.subr.mxu0 0.0
    %209 = vmatpush1.msra.mxu0 0.0
    %210 = vmatprep.subr.mxu0 0.0
    %211 = vmatpush1.msra.mxu0 0.0
    %212 = vmatprep.subr.mxu0 0.0
    %213 = vmatpush1.msra.mxu0 0.0
    %214 = vmatprep.subr.mxu0 0.0
    %215 = vmatpush1.msra.mxu0 0.0
    %216 = vmatprep.subr.mxu0 0.0
    %217 = vmatpush1.msra.mxu0 0.0
    %218 = vmatprep.subr.mxu0 0.0
    %219 = vmatpush1.msra.mxu0 0.0
    %220 = vmatprep.subr.mxu0 0.0
    %221 = vmatpush1.msra.mxu0 0.0
    %222 = vmatprep.subr.mxu0 0.0
    %223 = vmatpush1.msra.mxu0 0.0
    %224 = vmatprep.subr.mxu0 0.0
    %225 = vmatpush1.msra.mxu0 0.0
    %226 = vmatprep.subr.mxu0 0.0
    %227 = vmatpush1.msra.mxu0 0.0
    %228 = vmatprep.mubr.f32.mxu0 0.0
    %229 = vmatmul.mubr.f32.gmra.mrb[0].mxu0 %v159
    %v230 = vpop.f32.mrb[0].mxu0
    %v231 = vadd.f32 0.0, %v230
    %v232 = vpop.f32.mrb[0].mxu0
    %233 = vmatprep.mubr.f32.mxu0 0.0
    %234 = vmatmul.mubr.f32.gmra.mrb[0].mxu0 %v162
    %v235 = vpop.f32.mrb[0].mxu0
    %v236 = vadd.f32 0.0, %v235
    %v237 = vpop.f32.mrb[0].mxu0
    %238 = vdwg.mxu0
    %239 = vst [vmem:[%s3] sm:$0xff] %v231
    %240 = vst [vmem:[%s3 + $0x8] sm:$0xff] %v236
  $region21: #{encoder_forward.1} parent=0 // pred_fallthru
    _
  // Predicated region
  $region22: #{encoder_forward.1} parent=0 // pred_check
    _
  $region23: #{encoder_forward.1} parent=0 // pred_check_branch
    %242 = sbr.rel (0) target = $region25
  $region24: #{encoder_forward.1} parent=0 // pred_region
    _
  $region25: #{encoder_forward.1} parent=0 // pred_fallthru
    _
  // Predicated region
  $region26: #{encoder_forward.1} parent=0 // pred_check
    _
  $region27: #{encoder_forward.1} parent=0 // pred_check_branch
    %244 = sbr.rel (0) target = $region29
  $region28: #{encoder_forward.1} parent=0 // pred_region
    _
  $region29: #{encoder_forward.1} parent=0 // pred_fallthru
    _

</llo_original>
